<compile_context>
chip_gen: v6e
topology: v6e:2x2x1
jax: 0.10.0
libtpu: 0.0.40
codegen_flags: <defaults>
</compile_context>

<pallas_src>
import functools

import jax
import jax.numpy as jnp
from jax.experimental import pallas as pl
from jax.experimental.pallas import tpu as pltpu


def _attention_kernel(xs_ref, ys_ref, mrow_ref,
                      w_in_t_ref, w_out_a_t_ref, w_out_b_t_ref, b_out_ref,
                      out_ref, att_ref, *, approx_recip):
    xs_blk = xs_ref[...]                       # (BT, x_len, enc2)  compute dtype
    ys_blk = ys_ref[...]                       # (BT, y_len, dec)   compute dtype
    bt, x_len, enc2 = xs_blk.shape
    _, y_len, dec = ys_blk.shape
    cd = xs_blk.dtype
    f32 = jnp.float32

    # 1. xs_ = fc_in(xs) -- batch flattened into the MXU M dimension.
    xs_proj = jnp.dot(xs_blk.reshape(bt * x_len, enc2), w_in_t_ref[...],
                      preferred_element_type=f32)
    xs_proj = xs_proj.reshape(bt, x_len, dec)

    # 2. att = ys @ xs_^T  -- batched contraction on the last dims, no
    #    transpose materialized; f32 accumulation.
    att = jnp.einsum("byd,bxd->byx", ys_blk, xs_proj.astype(cd),
                     preferred_element_type=f32)          # (BT, y_len, x_len)

    #    masked_fill(PAD, -1e6): compact (BT, 1, x_len) row mask broadcast
    #    over the y axis (sublane broadcast).
    att = jnp.where(mrow_ref[...] != 0, jnp.float32(-1000000.0), att)

    #    softmax over x (f32 throughout).
    att_max = jnp.max(att, axis=-1, keepdims=True)
    att_exp = jnp.exp(att - att_max)
    denom = jnp.sum(att_exp, axis=-1, keepdims=True)
    att = att_exp * pl.reciprocal(denom, approx=approx_recip)

    # 3. att_xs = att @ xs -- batched.
    att_xs = jnp.einsum("byx,bxe->bye", att.astype(cd), xs_blk,
                        preferred_element_type=f32)       # (BT, y_len, enc2)

    # 4./5. output = tanh(fc_out(cat(att_xs, ys))) -- concat folded into the
    #       two weight halves; batch flattened into the M dimension.
    out = jnp.dot(att_xs.reshape(bt * y_len, enc2).astype(cd),
                  w_out_a_t_ref[...], preferred_element_type=f32)
    out = out + jnp.dot(ys_blk.reshape(bt * y_len, dec),
                        w_out_b_t_ref[...], preferred_element_type=f32)
    out = jnp.tanh(out + b_out_ref[...])

    out_ref[...] = out.reshape(bt, y_len, dec).astype(out_ref.dtype)
    att_ref[...] = att.astype(att_ref.dtype)


def attention_forward(xs, ys, src_lengths, w_in, w_out, b_out, *,
                      batch_tile=None, compute_dtype=jnp.float32):
    """Forward pass of the Attention module.

    xs:  (B, x_len, 2*enc_h) encoder outputs.
    ys:  (B, y_len, dec_h)   decoder states.
    src_lengths: (B,) int -- valid encoder length per batch; PAD positions are
        x >= src_lengths[b] (identical to the module's boolean PAD mask).
    w_in:  (dec_h, 2*enc_h)           fc_in weight (no bias).
    w_out: (dec_h, 2*enc_h + dec_h)   fc_out weight.
    b_out: (dec_h,)                   fc_out bias.
    compute_dtype: MXU operand dtype (f32 for exact, bf16 for v6e/v7x speed;
        accumulation and softmax stay f32 either way).
    Returns (output (B, y_len, dec_h) f32, att (B, y_len, x_len) f32).
    """
    B, x_len, enc2 = xs.shape
    _, y_len, dec = ys.shape
    cd = jnp.dtype(compute_dtype)
    out_dtype = jnp.float32

    # Pick the largest batch tile (<= 8) that divides B.
    if batch_tile is None:
        batch_tile = 1
        for d in range(1, min(B, 8) + 1):
            if B % d == 0:
                batch_tile = d
    bt = int(batch_tile)
    assert B % bt == 0, "batch_tile must divide batch size"

    # Compact PAD row-mask: (B, 1, x_len) int32, 1 where PAD.  This replaces
    # the full (B, y_len, x_len) mask tensor (y_len x less HBM/VMEM traffic).
    pos = jnp.arange(x_len, dtype=jnp.int32)[None, None, :]
    lengths = jnp.asarray(src_lengths, dtype=jnp.int32)[:, None, None]
    mask_rows = (pos >= lengths).astype(jnp.int32)        # (B, 1, x_len)

    xs_c = jnp.asarray(xs).astype(cd)
    ys_c = jnp.asarray(ys).astype(cd)
    w_in_t = jnp.asarray(w_in).T.astype(cd)               # (enc2, dec)
    w_out_a_t = jnp.asarray(w_out)[:, :enc2].T.astype(cd)  # (enc2, dec) -> att_xs
    w_out_b_t = jnp.asarray(w_out)[:, enc2:].T.astype(cd)  # (dec,  dec) -> ys
    b_out_2d = jnp.asarray(b_out).reshape(1, dec).astype(jnp.float32)

    kernel = functools.partial(
        _attention_kernel,
        approx_recip=(cd == jnp.dtype(jnp.bfloat16)))

    out, att = pl.pallas_call(
        kernel,
        out_shape=(jax.ShapeDtypeStruct((B, y_len, dec), out_dtype),
                   jax.ShapeDtypeStruct((B, y_len, x_len), out_dtype)),
        grid=(B // bt,),
        in_specs=[
            pl.BlockSpec((bt, x_len, enc2), lambda b: (b, 0, 0)),
            pl.BlockSpec((bt, y_len, dec), lambda b: (b, 0, 0)),
            pl.BlockSpec((bt, 1, x_len), lambda b: (b, 0, 0)),
            pl.BlockSpec((enc2, dec), lambda b: (0, 0)),
            pl.BlockSpec((enc2, dec), lambda b: (0, 0)),
            pl.BlockSpec((dec, dec), lambda b: (0, 0)),
            pl.BlockSpec((1, dec), lambda b: (0, 0)),
        ],
        out_specs=(pl.BlockSpec((bt, y_len, dec), lambda b: (b, 0, 0)),
                   pl.BlockSpec((bt, y_len, x_len), lambda b: (b, 0, 0))),
        compiler_params=pltpu.CompilerParams(
            dimension_semantics=("parallel",)),
    )(xs_c, ys_c, mask_rows, w_in_t, w_out_a_t, w_out_b_t, b_out_2d)
    return out, att


def _reference_forward(xs, ys, mask, w_in, w_out, b_out):
    """Plain-JAX reference reproducing the PyTorch forward exactly."""
    xs_ = jnp.einsum("bxe,de->bxd", xs, w_in)
    att = jnp.einsum("byd,bxd->byx", ys, xs_)
    att = jnp.where(mask, -1000000.0, att)
    att = jax.nn.softmax(att, axis=2)
    att_xs = jnp.einsum("byx,bxe->bye", att, xs)
    cat = jnp.concatenate([att_xs, ys], axis=2)
    out = jnp.tanh(jnp.einsum("byc,dc->byd", cat, w_out) + b_out)
    return out, att


if __name__ == "__main__":
    enc_hidden, dec_hidden = 16, 32
    B, x_len, y_len = 2, 8, 4
    enc2 = enc_hidden * 2

    key = jax.random.PRNGKey(0)
    k_xs, k_ys, k_win, k_wout, k_bout = jax.random.split(key, 5)

    xs = jax.random.normal(k_xs, (B, x_len, enc2), dtype=jnp.float32)
    ys = jax.random.normal(k_ys, (B, y_len, dec_hidden), dtype=jnp.float32)

    # PAD structure: batch 0 has no padding, batch 1 pads the last 3 steps.
    src_lengths = jnp.array([x_len, x_len - 3], dtype=jnp.int32)
    pos = jnp.arange(x_len)[None, None, :]                      # (1, 1, x_len)
    mask = pos >= src_lengths[:, None, None]                    # (B, 1, x_len)
    mask = jnp.broadcast_to(mask, (B, y_len, x_len))            # PyTorch-style mask

    # Deterministic "Linear"-like init (uniform in +-1/sqrt(fan_in)).
    bound_in = 1.0 / jnp.sqrt(jnp.float32(enc2))
    bound_out = 1.0 / jnp.sqrt(jnp.float32(enc2 + dec_hidden))
    w_in = jax.random.uniform(k_win, (dec_hidden, enc2),
                              minval=-bound_in, maxval=bound_in, dtype=jnp.float32)
    w_out = jax.random.uniform(k_wout, (dec_hidden, enc2 + dec_hidden),
                               minval=-bound_out, maxval=bound_out, dtype=jnp.float32)
    b_out = jax.random.uniform(k_bout, (dec_hidden,),
                               minval=-bound_out, maxval=bound_out, dtype=jnp.float32)

    ref_out, ref_att = _reference_forward(xs, ys, mask, w_in, w_out, b_out)

    # Exact (f32 MXU operands) path.
    out, att = attention_forward(xs, ys, src_lengths, w_in, w_out, b_out,
                                 compute_dtype=jnp.float32)
    out, att = jax.block_until_ready(out), jax.block_until_ready(att)
    assert jnp.allclose(out, ref_out, atol=1e-5, rtol=1e-5)
    assert jnp.allclose(att, ref_att, atol=1e-5, rtol=1e-5)

    # Fast path: bf16 MXU operands (f32 accumulation / softmax).  Reduced
    # precision by construction -> loose sanity tolerance only.
    out_bf, att_bf = attention_forward(xs, ys, src_lengths, w_in, w_out, b_out,
                                       compute_dtype=jnp.bfloat16)
    out_bf = jax.block_until_ready(out_bf)
    att_bf = jax.block_until_ready(att_bf)
    assert jnp.allclose(out_bf, ref_out, atol=2e-1, rtol=2e-1)
    assert jnp.allclose(att_bf, ref_att, atol=2e-1, rtol=2e-1)

    print("KERNEL_OK")
</pallas_src>

<mosaic_0001>
module attributes {stable_mosaic.version = 11 : i64} {
  func.func @_attention_kernel(%arg0: i32, %arg1: memref<2x8x32xf32, #tpu.memory_space<vmem>>, %arg2: memref<2x4x32xf32, #tpu.memory_space<vmem>>, %arg3: memref<2x1x8xi32, #tpu.memory_space<vmem>>, %arg4: memref<32x32xf32, #tpu.memory_space<vmem>>, %arg5: memref<32x32xf32, #tpu.memory_space<vmem>>, %arg6: memref<32x32xf32, #tpu.memory_space<vmem>>, %arg7: memref<1x32xf32, #tpu.memory_space<vmem>>, %arg8: memref<2x4x32xf32, #tpu.memory_space<vmem>>, %arg9: memref<2x4x8xf32, #tpu.memory_space<vmem>>) attributes {dimension_semantics = [#tpu.dimension_semantics<parallel>], iteration_bounds = array<i64: 1>, scalar_prefetch = 0 : i64, scratch_operands = 0 : i64, tpu.core_type = #tpu.core_type<tc>, window_params = [{transform_indices = @transform_0, window_bounds = array<i64: 2, 8, 32>}, {transform_indices = @transform_1, window_bounds = array<i64: 2, 4, 32>}, {transform_indices = @transform_2, window_bounds = array<i64: 2, 1, 8>}, {pipeline_mode = #tpu.pipeline_mode<synchronous>, transform_indices = @transform_3, window_bounds = array<i64: 32, 32>}, {pipeline_mode = #tpu.pipeline_mode<synchronous>, transform_indices = @transform_4, window_bounds = array<i64: 32, 32>}, {pipeline_mode = #tpu.pipeline_mode<synchronous>, transform_indices = @transform_5, window_bounds = array<i64: 32, 32>}, {pipeline_mode = #tpu.pipeline_mode<synchronous>, transform_indices = @transform_6, window_bounds = array<i64: 1, 32>}, {transform_indices = @transform_7, window_bounds = array<i64: 2, 4, 32>}, {transform_indices = @transform_8, window_bounds = array<i64: 2, 4, 8>}]} {
    %c0 = arith.constant 0 : index
    %c0_0 = arith.constant 0 : index
    %c0_1 = arith.constant 0 : index
    %0 = vector.load %arg1[%c0, %c0_0, %c0_1] : memref<2x8x32xf32, #tpu.memory_space<vmem>>, vector<2x8x32xf32>
    %c0_2 = arith.constant 0 : index
    %c0_3 = arith.constant 0 : index
    %c0_4 = arith.constant 0 : index
    %1 = vector.load %arg2[%c0_2, %c0_3, %c0_4] : memref<2x4x32xf32, #tpu.memory_space<vmem>>, vector<2x4x32xf32>
    %2 = vector.shape_cast %0 : vector<2x8x32xf32> to vector<16x32xf32>
    %c0_5 = arith.constant 0 : index
    %c0_6 = arith.constant 0 : index
    %3 = vector.load %arg4[%c0_5, %c0_6] : memref<32x32xf32, #tpu.memory_space<vmem>>, vector<32x32xf32>
    %cst = arith.constant dense<0.000000e+00> : vector<16x32xf32>
    %4 = tpu.matmul %2, %3, %cst {dimension_numbers = #tpu.dot_dimension_numbers<[1], [0], [0], [1], [0, 0, 1, 1], [], []>} : vector<16x32xf32>, vector<32x32xf32>, vector<16x32xf32> -> vector<16x32xf32>
    %5 = vector.shape_cast %4 : vector<16x32xf32> to vector<2x8x32xf32>
    "tpu.trace_start"() <{level = 10 : i32, message = "byd,bxd->byx"}> : () -> ()
    %cst_7 = arith.constant dense<0.000000e+00> : vector<2x4x8xf32>
    %6 = tpu.matmul %1, %5, %cst_7 {dimension_numbers = #tpu.dot_dimension_numbers<[2], [2], [1], [1], [0, 0, 0, 1, 1, 1], [0], [0]>} : vector<2x4x32xf32>, vector<2x8x32xf32>, vector<2x4x8xf32> -> vector<2x4x8xf32>
    "tpu.trace_stop"() : () -> ()
    %c0_8 = arith.constant 0 : index
    %c0_9 = arith.constant 0 : index
    %c0_10 = arith.constant 0 : index
    %7 = vector.load %arg3[%c0_8, %c0_9, %c0_10] : memref<2x1x8xi32, #tpu.memory_space<vmem>>, vector<2x1x8xi32>
    %c0_i32 = arith.constant 0 : i32
    %8 = vector.broadcast %c0_i32 : i32 to vector<2x1x8xi32>
    %9 = arith.cmpi ne, %7, %8 : vector<2x1x8xi32>
    %cst_11 = arith.constant -1.000000e+06 : f32
    %10 = vector.shape_cast %9 : vector<2x1x8xi1> to vector<2x1x8xi1>
    %11 = vector.broadcast %10 : vector<2x1x8xi1> to vector<2x4x8xi1>
    %12 = vector.broadcast %cst_11 : f32 to vector<2x4x8xf32>
    %13 = arith.select %11, %12, %6 : vector<2x4x8xi1>, vector<2x4x8xf32>
    %cst_12 = arith.constant dense<0xFF800000> : vector<2x4xf32>
    %14 = vector.multi_reduction <maximumf>, %13, %cst_12 [2] : vector<2x4x8xf32> to vector<2x4xf32>
    %15 = vector.shape_cast %14 : vector<2x4xf32> to vector<2x4x1xf32>
    %16 = vector.broadcast %15 : vector<2x4x1xf32> to vector<2x4x8xf32>
    %17 = arith.subf %13, %16 : vector<2x4x8xf32>
    %18 = math.exp %17 : vector<2x4x8xf32>
    %cst_13 = arith.constant dense<0.000000e+00> : vector<2x4xf32>
    %19 = vector.multi_reduction <add>, %18, %cst_13 [2] : vector<2x4x8xf32> to vector<2x4xf32>
    %20 = vector.shape_cast %19 : vector<2x4xf32> to vector<2x4x1xf32>
    %21 = tpu.reciprocal %20 : vector<2x4x1xf32> -> vector<2x4x1xf32>
    %22 = vector.broadcast %21 : vector<2x4x1xf32> to vector<2x4x8xf32>
    %23 = arith.mulf %18, %22 : vector<2x4x8xf32>
    "tpu.trace_start"() <{level = 10 : i32, message = "byx,bxe->bye"}> : () -> ()
    %cst_14 = arith.constant dense<0.000000e+00> : vector<2x4x32xf32>
    %24 = tpu.matmul %23, %0, %cst_14 {dimension_numbers = #tpu.dot_dimension_numbers<[2], [1], [1], [2], [0, 0, 0, 1, 1, 2], [0], [0]>} : vector<2x4x8xf32>, vector<2x8x32xf32>, vector<2x4x32xf32> -> vector<2x4x32xf32>
    "tpu.trace_stop"() : () -> ()
    %25 = vector.shape_cast %24 : vector<2x4x32xf32> to vector<8x32xf32>
    %c0_15 = arith.constant 0 : index
    %c0_16 = arith.constant 0 : index
    %26 = vector.load %arg5[%c0_15, %c0_16] : memref<32x32xf32, #tpu.memory_space<vmem>>, vector<32x32xf32>
    %cst_17 = arith.constant dense<0.000000e+00> : vector<8x32xf32>
    %27 = tpu.matmul %25, %26, %cst_17 {dimension_numbers = #tpu.dot_dimension_numbers<[1], [0], [0], [1], [0, 0, 1, 1], [], []>} : vector<8x32xf32>, vector<32x32xf32>, vector<8x32xf32> -> vector<8x32xf32>
    %28 = vector.shape_cast %1 : vector<2x4x32xf32> to vector<8x32xf32>
    %c0_18 = arith.constant 0 : index
    %c0_19 = arith.constant 0 : index
    %29 = vector.load %arg6[%c0_18, %c0_19] : memref<32x32xf32, #tpu.memory_space<vmem>>, vector<32x32xf32>
    %cst_20 = arith.constant dense<0.000000e+00> : vector<8x32xf32>
    %30 = tpu.matmul %28, %29, %cst_20 {dimension_numbers = #tpu.dot_dimension_numbers<[1], [0], [0], [1], [0, 0, 1, 1], [], []>} : vector<8x32xf32>, vector<32x32xf32>, vector<8x32xf32> -> vector<8x32xf32>
    %31 = arith.addf %27, %30 : vector<8x32xf32>
    %c0_21 = arith.constant 0 : index
    %c0_22 = arith.constant 0 : index
    %32 = vector.load %arg7[%c0_21, %c0_22] : memref<1x32xf32, #tpu.memory_space<vmem>>, vector<1x32xf32>
    %33 = vector.broadcast %32 : vector<1x32xf32> to vector<8x32xf32>
    %34 = arith.addf %31, %33 : vector<8x32xf32>
    %35 = math.tanh %34 : vector<8x32xf32>
    %36 = vector.shape_cast %35 : vector<8x32xf32> to vector<2x4x32xf32>
    %c0_23 = arith.constant 0 : index
    %c0_24 = arith.constant 0 : index
    %c0_25 = arith.constant 0 : index
    %37 = vector.load %arg8[%c0_23, %c0_24, %c0_25] : memref<2x4x32xf32, #tpu.memory_space<vmem>>, vector<2x4x32xf32>
    tpu.vector_store %arg8[%c0_23, %c0_24, %c0_25], %36 {strides = array<i32>} : memref<2x4x32xf32, #tpu.memory_space<vmem>>, vector<2x4x32xf32>,
    %c0_26 = arith.constant 0 : index
    %c0_27 = arith.constant 0 : index
    %c0_28 = arith.constant 0 : index
    %38 = vector.load %arg9[%c0_26, %c0_27, %c0_28] : memref<2x4x8xf32, #tpu.memory_space<vmem>>, vector<2x4x8xf32>
    tpu.vector_store %arg9[%c0_26, %c0_27, %c0_28], %23 {strides = array<i32>} : memref<2x4x8xf32, #tpu.memory_space<vmem>>, vector<2x4x8xf32>,
    return
  }
  func.func @transform_0(%arg0: i32) -> (i32, i32, i32) {
    %c0_i32 = arith.constant 0 : i32
    %c0_i32_0 = arith.constant 0 : i32
    %c0_i32_1 = arith.constant 0 : i32
    return %arg0, %c0_i32, %c0_i32_0 : i32, i32, i32
  }
  func.func @transform_1(%arg0: i32) -> (i32, i32, i32) {
    %c0_i32 = arith.constant 0 : i32
    %c0_i32_0 = arith.constant 0 : i32
    %c0_i32_1 = arith.constant 0 : i32
    return %arg0, %c0_i32, %c0_i32_0 : i32, i32, i32
  }
  func.func @transform_2(%arg0: i32) -> (i32, i32, i32) {
    %c0_i32 = arith.constant 0 : i32
    %c0_i32_0 = arith.constant 0 : i32
    %c0_i32_1 = arith.constant 0 : i32
    return %arg0, %c0_i32, %c0_i32_0 : i32, i32, i32
  }
  func.func @transform_3(%arg0: i32) -> (i32, i32) {
    %c0_i32 = arith.constant 0 : i32
    %c0_i32_0 = arith.constant 0 : i32
    %c0_i32_1 = arith.constant 0 : i32
    return %c0_i32, %c0_i32_0 : i32, i32
  }
  func.func @transform_4(%arg0: i32) -> (i32, i32) {
    %c0_i32 = arith.constant 0 : i32
    %c0_i32_0 = arith.constant 0 : i32
    %c0_i32_1 = arith.constant 0 : i32
    return %c0_i32, %c0_i32_0 : i32, i32
  }
  func.func @transform_5(%arg0: i32) -> (i32, i32) {
    %c0_i32 = arith.constant 0 : i32
    %c0_i32_0 = arith.constant 0 : i32
    %c0_i32_1 = arith.constant 0 : i32
    return %c0_i32, %c0_i32_0 : i32, i32
  }
  func.func @transform_6(%arg0: i32) -> (i32, i32) {
    %c0_i32 = arith.constant 0 : i32
    %c0_i32_0 = arith.constant 0 : i32
    %c0_i32_1 = arith.constant 0 : i32
    return %c0_i32, %c0_i32_0 : i32, i32
  }
  func.func @transform_7(%arg0: i32) -> (i32, i32, i32) {
    %c0_i32 = arith.constant 0 : i32
    %c0_i32_0 = arith.constant 0 : i32
    %c0_i32_1 = arith.constant 0 : i32
    return %arg0, %c0_i32, %c0_i32_0 : i32, i32, i32
  }
  func.func @transform_8(%arg0: i32) -> (i32, i32, i32) {
    %c0_i32 = arith.constant 0 : i32
    %c0_i32_0 = arith.constant 0 : i32
    %c0_i32_1 = arith.constant 0 : i32
    return %arg0, %c0_i32, %c0_i32_0 : i32, i32, i32
  }
}

</mosaic_0001>

<llo_original>
// kernel: tpu_custom_call.1
$region0: #{tpu_custom_call.1}
  #allocation0 [shape = 'u32[]', space=smem, size = 0x4, offset = 0x4, fixed_abs, tag = 'smem constant byte address 0x4 - core index']
  #allocation1 [shape = 'u32[144,128]{1,0:T(1,128)}', space=vmem, size = 0x12000, scoped, tag = 'internal scratch']
  %s0 = inlined_call_operand.hbm [shape: f32[2,8,32], index: 0, kind: input, shape index: {}]
  %s1 = inlined_call_operand.hbm [shape: f32[2,4,32], index: 1, kind: input, shape index: {}]
  %s2 = inlined_call_operand.vmem [shape: s32[2,1,8], index: 2, kind: input, shape index: {}]
  %s3 = inlined_call_operand.hbm [shape: f32[32,32], index: 3, kind: input, shape index: {}]
  %s4 = inlined_call_operand.hbm [shape: f32[32,32], index: 4, kind: input, shape index: {}]
  %s5 = inlined_call_operand.hbm [shape: f32[32,32], index: 5, kind: input, shape index: {}]
  %s6 = inlined_call_operand.vmem [shape: f32[1,32], index: 6, kind: input, shape index: {}]
  %s7 = inlined_call_operand.hbm [shape: f32[2,4,32], index: 7, kind: output, shape index: {0}]
  %s8 = inlined_call_operand.hbm [shape: f32[2,4,8], index: 8, kind: output, shape index: {1}]
  %9 = xla_tuple %s7, %s8
  %s10 = sld [smem:[#allocation0]]
  $region66: #{tpu_custom_call.1} parent=0
    _
  %s12 = ssub.s32 1, %s10
  %s13 = scalar_select 0, %s12, %s10
  $region1: #{tpu_custom_call.1} parent=0
    #allocation2 [shape = 'u8[8192]{0}', space=vmem, size = 0x2000, scoped, tag = 'input window, operand 0, single buffered']
    #allocation3 [shape = 's32[1]{0}', space=sflag, size = 0x4, scoped, tag = 'scoped memory for tpu_custom_call.1']
    #allocation4 [shape = 's32[1]{0}', space=sflag, size = 0x4, scoped, tag = 'scoped memory for tpu_custom_call.1']
    #allocation5 [shape = 'u8[4096]{0}', space=vmem, size = 0x1000, scoped, tag = 'input window, operand 1, single buffered']
    #allocation6 [shape = 's32[1]{0}', space=sflag, size = 0x4, scoped, tag = 'scoped memory for tpu_custom_call.1']
    #allocation7 [shape = 'u8[16384]{0}', space=vmem, size = 0x4000, scoped, tag = 'input window, operand 3, single buffered']
    #allocation8 [shape = 'u8[16384]{0}', space=vmem, size = 0x4000, scoped, tag = 'input window, operand 4, single buffered']
    #allocation9 [shape = 's32[1]{0}', space=sflag, size = 0x4, scoped, tag = 'scoped memory for tpu_custom_call.1']
    #allocation10 [shape = 'u8[16384]{0}', space=vmem, size = 0x4000, scoped, tag = 'input window, operand 5, single buffered']
    #allocation11 [shape = 'u8[4096]{0}', space=vmem, size = 0x1000, scoped, tag = 'output window, operand 0, single buffered']
    #allocation12 [shape = 'u8[4096]{0}', space=vmem, size = 0x1000, scoped, tag = 'output window, operand 1, single buffered']
    #allocation13 [shape = 's32[1]{0}', space=sflag, size = 0x4, scoped, tag = 'scoped memory for tpu_custom_call.1']
    %14 = vsyncpa [#allocation3], 0
    %15 = vsyncpa [#allocation6], 0
    %16 = vsyncpa [#allocation9], 0
    %17 = vsyncpa [#allocation4], 0
    %18 = vsyncpa [#allocation13], 0
    // Predicated region
    $region2: #{tpu_custom_call.1} parent=1 // pred_check
      _
    $region3: #{tpu_custom_call.1} parent=1 // pred_check_branch
      %20 = sbr.rel (0) target = $region5
    $region4: #{tpu_custom_call.1} parent=1 // pred_region
      %s22 = ssub.s32 256, 256
      %23 = vsyncadd [#allocation3], %s22
      %s24 = sshll.u32 [#allocation2], 4
      %s25 = int_to_ptr.vmem [resolvable:$true] %s24
      %30 = dma.hbm_to_vmem [thread:$0]  %s0, 256, %s25, [#allocation3], 128, 128, 8
    $region5: #{tpu_custom_call.1} parent=1 // pred_fallthru
      _
    // Predicated region
    $region6: #{tpu_custom_call.1} parent=1 // pred_check
      _
    $region7: #{tpu_custom_call.1} parent=1 // pred_check_branch
      %32 = sbr.rel (0) target = $region9
    $region8: #{tpu_custom_call.1} parent=1 // pred_region
      %s34 = ssub.s32 128, 128
      %35 = vsyncadd [#allocation6], %s34
      %s36 = sshll.u32 [#allocation5], 4
      %s37 = int_to_ptr.vmem [resolvable:$true] %s36
      %42 = dma.hbm_to_vmem [thread:$0]  %s1, 128, %s37, [#allocation6], 64, 64, 4
    $region9: #{tpu_custom_call.1} parent=1 // pred_fallthru
      _
    // Predicated region
    $region10: #{tpu_custom_call.1} parent=1 // pred_check
      _
    $region11: #{tpu_custom_call.1} parent=1 // pred_check_branch
      %44 = sbr.rel (0) target = $region13
    $region12: #{tpu_custom_call.1} parent=1 // pred_region
      _
    $region13: #{tpu_custom_call.1} parent=1 // pred_fallthru
      _
    // Predicated region
    $region14: #{tpu_custom_call.1} parent=1 // pred_check
      _
    $region15: #{tpu_custom_call.1} parent=1 // pred_check_branch
      %46 = sbr.rel (0) target = $region17
    $region16: #{tpu_custom_call.1} parent=1 // pred_region
      %s48 = ssub.s32 512, 512
      %49 = vsyncadd [#allocation6], %s48
      %s50 = sshll.u32 [#allocation7], 4
      %s51 = int_to_ptr.vmem [resolvable:$true] %s50
      %56 = dma.hbm_to_vmem [thread:$0]  %s3, 512, %s51, [#allocation6], 128, 128, 8
    $region17: #{tpu_custom_call.1} parent=1 // pred_fallthru
      _
    // Predicated region
    $region18: #{tpu_custom_call.1} parent=1 // pred_check
      _
    $region19: #{tpu_custom_call.1} parent=1 // pred_check_branch
      %58 = sbr.rel (0) target = $region21
    $region20: #{tpu_custom_call.1} parent=1 // pred_region
      %s60 = ssub.s32 512, 512
      %61 = vsyncadd [#allocation9], %s60
      %s62 = sshll.u32 [#allocation8], 4
      %s63 = int_to_ptr.vmem [resolvable:$true] %s62
      %68 = dma.hbm_to_vmem [thread:$0]  %s4, 512, %s63, [#allocation9], 128, 128, 8
    $region21: #{tpu_custom_call.1} parent=1 // pred_fallthru
      _
    // Predicated region
    $region22: #{tpu_custom_call.1} parent=1 // pred_check
      _
    $region23: #{tpu_custom_call.1} parent=1 // pred_check_branch
      %70 = sbr.rel (0) target = $region25
    $region24: #{tpu_custom_call.1} parent=1 // pred_region
      %s72 = ssub.s32 512, 512
      %73 = vsyncadd [#allocation9], %s72
      %s74 = sshll.u32 [#allocation10], 4
      %s75 = int_to_ptr.vmem [resolvable:$true] %s74
      %80 = dma.hbm_to_vmem [thread:$0]  %s5, 512, %s75, [#allocation9], 128, 128, 8
    $region25: #{tpu_custom_call.1} parent=1 // pred_fallthru
      _
    // Predicated region
    $region26: #{tpu_custom_call.1} parent=1 // pred_check
      _
    $region27: #{tpu_custom_call.1} parent=1 // pred_check_branch
      %82 = sbr.rel (0) target = $region29
    $region28: #{tpu_custom_call.1} parent=1 // pred_region
      _
    $region29: #{tpu_custom_call.1} parent=1 // pred_fallthru
      _
    // Predicated region
    $region30: #{tpu_custom_call.1} parent=1 // pred_check
      _
    $region31: #{tpu_custom_call.1} parent=1 // pred_check_branch
      %84 = sbr.rel (0) target = $region33
    $region32: #{tpu_custom_call.1} parent=1 // pred_region
      %85 = dma.done [#allocation3], 256
    $region33: #{tpu_custom_call.1} parent=1 // pred_fallthru
      _
    // Predicated region
    $region34: #{tpu_custom_call.1} parent=1 // pred_check
      _
    $region35: #{tpu_custom_call.1} parent=1 // pred_check_branch
      %87 = sbr.rel (0) target = $region37
    $region36: #{tpu_custom_call.1} parent=1 // pred_region
      %88 = dma.done [#allocation6], 128
    $region37: #{tpu_custom_call.1} parent=1 // pred_fallthru
      _
    // Predicated region
    $region38: #{tpu_custom_call.1} parent=1 // pred_check
      _
    $region39: #{tpu_custom_call.1} parent=1 // pred_check_branch
      %90 = sbr.rel (0) target = $region41
    $region40: #{tpu_custom_call.1} parent=1 // pred_region
      %91 = dma.done [#allocation6], 512
    $region41: #{tpu_custom_call.1} parent=1 // pred_fallthru
      _
    // Predicated region
    $region42: #{tpu_custom_call.1} parent=1 // pred_check
      _
    $region43: #{tpu_custom_call.1} parent=1 // pred_check_branch
      %93 = sbr.rel (0) target = $region45
    $region44: #{tpu_custom_call.1} parent=1 // pred_region
      %94 = dma.done [#allocation9], 512
    $region45: #{tpu_custom_call.1} parent=1 // pred_fallthru
      _
    // Predicated region
    $region46: #{tpu_custom_call.1} parent=1 // pred_check
      _
    $region47: #{tpu_custom_call.1} parent=1 // pred_check_branch
      %96 = sbr.rel (0) target = $region49
    $region48: #{tpu_custom_call.1} parent=1 // pred_region
      %97 = dma.done [#allocation9], 512
    $region49: #{tpu_custom_call.1} parent=1 // pred_fallthru
      _
    %v98 = vld [vmem:[#allocation2] sm:$0xff]
    %v99 = vld [vmem:[#allocation2 + $0x8] sm:$0xff]
    %v100 = vld [vmem:[#allocation5] sm:$0xf]
    %v101 = vld [vmem:[#allocation5 + $0x4] sm:$0xf]
    %v102 = vld [vmem:[#allocation7] sm:$0xff]
    %v103 = vld [vmem:[#allocation7 + $0x8] sm:$0xff]
    %v104 = vld [vmem:[#allocation7 + $0x10] sm:$0xff]
    %v105 = vld [vmem:[#allocation7 + $0x18] sm:$0xff]
    %vm106 = vcmask 261120
    %v108 = vsel %vm106, %v98, 0
    %v111 = vsel %vm106, %v99, 0
    %113 = vmatprep.subr.mxu0 0.0
    %114 = vmatpush1.msra.mxu0 0.0
    %115 = vmatprep.subr.mxu0 0.0
    %116 = vmatpush1.msra.mxu0 0.0
    %117 = vmatprep.subr.mxu0 0.0
    %118 = vmatpush1.msra.mxu0 0.0
    %119 = vmatprep.subr.mxu0 0.0
    %120 = vmatpush1.msra.mxu0 0.0
    %121 = vmatprep.subr.mxu0 0.0
    %122 = vmatpush1.msra.mxu0 0.0
    %123 = vmatprep.subr.mxu0 0.0
    %124 = vmatpush1.msra.mxu0 0.0
    %125 = vmatprep.subr.mxu0 0.0
    %126 = vmatpush1.msra.mxu0 0.0
    %127 = vmatprep.subr.mxu0 0.0
    %128 = vmatpush1.msra.mxu0 0.0
    %129 = vmatprep.subr.mxu0 0.0
    %130 = vmatpush1.msra.mxu0 0.0
    %131 = vmatprep.subr.mxu0 0.0
    %132 = vmatpush1.msra.mxu0 0.0
    %133 = vmatprep.subr.mxu0 0.0
    %134 = vmatpush1.msra.mxu0 0.0
    %135 = vmatprep.subr.mxu0 0.0
    %136 = vmatpush1.msra.mxu0 0.0
    %137 = vmatprep.subr.mxu0 0.0
    %138 = vmatpush1.msra.mxu0 %v105
    %139 = vmatprep.subr.mxu0 0.0
    %140 = vmatpush1.msra.mxu0 %v104
    %141 = vmatprep.subr.mxu0 0.0
    %142 = vmatpush1.msra.mxu0 %v103
    %143 = vmatprep.subr.mxu0 0.0
    %144 = vmatpush1.msra.mxu0 %v102
    %145 = vmatprep.subr.mxu0 0.0
    %146 = vmatpush2.msra.mxu0 0.0
    %147 = vmatprep.subr.mxu0 0.0
    %148 = vmatpush2.msra.mxu0 0.0
    %149 = vmatprep.subr.mxu0 0.0
    %150 = vmatpush2.msra.mxu0 0.0
    %151 = vmatprep.subr.mxu0 0.0
    %152 = vmatpush2.msra.mxu0 0.0
    %153 = vmatprep.subr.mxu0 0.0
    %154 = vmatpush2.msra.mxu0 0.0
    %155 = vmatprep.subr.mxu0 0.0
    %156 = vmatpush2.msra.mxu0 0.0
    %157 = vmatprep.subr.mxu0 0.0
    %158 = vmatpush2.msra.mxu0 0.0
    %159 = vmatprep.subr.mxu0 0.0
    %160 = vmatpush2.msra.mxu0 0.0
    %161 = vmatprep.subr.mxu0 0.0
    %162 = vmatpush2.msra.mxu0 0.0
    %163 = vmatprep.subr.mxu0 0.0
    %164 = vmatpush2.msra.mxu0 0.0
    %165 = vmatprep.subr.mxu0 0.0
    %166 = vmatpush2.msra.mxu0 0.0
    %167 = vmatprep.subr.mxu0 0.0
    %168 = vmatpush2.msra.mxu0 0.0
    %169 = vmatprep.subr.mxu0 0.0
    %170 = vmatpush2.msra.mxu0 0.0
    %171 = vmatprep.subr.mxu0 0.0
    %172 = vmatpush2.msra.mxu0 0.0
    %173 = vmatprep.subr.mxu0 0.0
    %174 = vmatpush2.msra.mxu0 0.0
    %175 = vmatprep.subr.mxu0 0.0
    %176 = vmatpush2.msra.mxu0 0.0
    %177 = vmatprep.mubr.f32.mxu0 0.0
    %178 = vmatmul.mubr.f32.gmra.mxu0 %v108
    %v179 = vpop.f32.mrf.mxu0
    %v180 = vadd.f32 0.0, %v179
    %v181 = vpop.f32.mrf.mxu0
    %182 = vmatprep.mubr.f32.mxu0 0.0
    %183 = vmatmul.mubr.f32.gmra.mxu0 %v111
    %v184 = vpop.f32.mrf.mxu0
    %v185 = vadd.f32 0.0, %v184
    %v186 = vpop.f32.mrf.mxu0
    %187 = vdwg.mxu0
    %v189 = vsel %vm106, %v100, 0
    %v192 = vsel %vm106, %v180, 0
    %194 = vmatprep.subr.mxu0 0.0
    %195 = vmatpush1.xpose.msra.mxu0 0.0
    %196 = vmatprep.subr.mxu0 0.0
    %197 = vmatpush1.xpose.msra.mxu0 0.0
    %198 = vmatprep.subr.mxu0 0.0
    %199 = vmatpush1.xpose.msra.mxu0 0.0
    %200 = vmatprep.subr.mxu0 0.0
    %201 = vmatpush1.xpose.msra.mxu0 0.0
    %202 = vmatprep.subr.mxu0 0.0
    %203 = vmatpush1.xpose.msra.mxu0 0.0
    %204 = vmatprep.subr.mxu0 0.0
    %205 = vmatpush1.xpose.msra.mxu0 0.0
    %206 = vmatprep.subr.mxu0 0.0
    %207 = vmatpush1.xpose.msra.mxu0 0.0
    %208 = vmatprep.subr.mxu0 0.0
    %209 = vmatpush1.xpose.msra.mxu0 0.0
    %210 = vmatprep.subr.mxu0 0.0
    %211 = vmatpush1.xpose.msra.mxu0 0.0
    %212 = vmatprep.subr.mxu0 0.0
    %213 = vmatpush1.xpose.msra.mxu0 0.0
    %214 = vmatprep.subr.mxu0 0.0
    %215 = vmatpush1.xpose.msra.mxu0 0.0
    %216 = vmatprep.subr.mxu0 0.0
    %217 = vmatpush1.xpose.msra.mxu0 0.0
    %218 = vmatprep.subr.mxu0 0.0
    %219 = vmatpush1.xpose.msra.mxu0 0.0
    %220 = vmatprep.subr.mxu0 0.0
    %221 = vmatpush1.xpose.msra.mxu0 0.0
    %222 = vmatprep.subr.mxu0 0.0
    %223 = vmatpush1.xpose.msra.mxu0 0.0
    %224 = vmatprep.subr.mxu0 0.0
    %225 = vmatpush1.xpose.msra.mxu0 %v192
    %226 = vmatprep.subr.mxu0 0.0
    %227 = vmatpush2.xpose.msra.mxu0 0.0
    %228 = vmatprep.subr.mxu0 0.0
    %229 = vmatpush2.xpose.msra.mxu0 0.0
    %230 = vmatprep.subr.mxu0 0.0
    %231 = vmatpush2.xpose.msra.mxu0 0.0
    %232 = vmatprep.subr.mxu0 0.0
    %233 = vmatpush2.xpose.msra.mxu0 0.0
    %234 = vmatprep.subr.mxu0 0.0
    %235 = vmatpush2.xpose.msra.mxu0 0.0
    %236 = vmatprep.subr.mxu0 0.0
    %237 = vmatpush2.xpose.msra.mxu0 0.0
    %238 = vmatprep.subr.mxu0 0.0
    %239 = vmatpush2.xpose.msra.mxu0 0.0
    %240 = vmatprep.subr.mxu0 0.0
    %241 = vmatpush2.xpose.msra.mxu0 0.0
    %242 = vmatprep.subr.mxu0 0.0
    %243 = vmatpush2.xpose.msra.mxu0 0.0
    %244 = vmatprep.subr.mxu0 0.0
    %245 = vmatpush2.xpose.msra.mxu0 0.0
    %246 = vmatprep.subr.mxu0 0.0
    %247 = vmatpush2.xpose.msra.mxu0 0.0
    %248 = vmatprep.subr.mxu0 0.0
    %249 = vmatpush2.xpose.msra.mxu0 0.0
    %250 = vmatprep.subr.mxu0 0.0
    %251 = vmatpush2.xpose.msra.mxu0 0.0
    %252 = vmatprep.subr.mxu0 0.0
    %253 = vmatpush2.xpose.msra.mxu0 0.0
    %254 = vmatprep.subr.mxu0 0.0
    %255 = vmatpush2.xpose.msra.mxu0 0.0
    %256 = vmatprep.subr.mxu0 0.0
    %257 = vmatpush2.xpose.msra.mxu0 0.0
    %258 = vmatprep.mubr.f32.mxu0 0.0
    %259 = vmatmul.mubr.f32.gmra.mxu0 %v189
    %v260 = vpop.f32.mrf.mxu0
    %v261 = vadd.f32 0.0, %v260
    %v262 = vpop.f32.mrf.mxu0
    %263 = vdwg.mxu0
    %v265 = vsel %vm106, %v101, 0
    %v268 = vsel %vm106, %v185, 0
    %270 = vmatprep.subr.mxu0 0.0
    %271 = vmatpush1.xpose.msra.mxu0 0.0
    %272 = vmatprep.subr.mxu0 0.0
    %273 = vmatpush1.xpose.msra.mxu0 0.0
    %274 = vmatprep.subr.mxu0 0.0
    %275 = vmatpush1.xpose.msra.mxu0 0.0
    %276 = vmatprep.subr.mxu0 0.0
    %277 = vmatpush1.xpose.msra.mxu0 0.0
    %278 = vmatprep.subr.mxu0 0.0
    %279 = vmatpush1.xpose.msra.mxu0 0.0
    %280 = vmatprep.subr.mxu0 0.0
    %281 = vmatpush1.xpose.msra.mxu0 0.0
    %282 = vmatprep.subr.mxu0 0.0
    %283 = vmatpush1.xpose.msra.mxu0 0.0
    %284 = vmatprep.subr.mxu0 0.0
    %285 = vmatpush1.xpose.msra.mxu0 0.0
    %286 = vmatprep.subr.mxu0 0.0
    %287 = vmatpush1.xpose.msra.mxu0 0.0
    %288 = vmatprep.subr.mxu0 0.0
    %289 = vmatpush1.xpose.msra.mxu0 0.0
    %290 = vmatprep.subr.mxu0 0.0
    %291 = vmatpush1.xpose.msra.mxu0 0.0
    %292 = vmatprep.subr.mxu0 0.0
    %293 = vmatpush1.xpose.msra.mxu0 0.0
    %294 = vmatprep.subr.mxu0 0.0
    %295 = vmatpush1.xpose.msra.mxu0 0.0
    %296 = vmatprep.subr.mxu0 0.0
    %297 = vmatpush1.xpose.msra.mxu0 0.0
    %298 = vmatprep.subr.mxu0 0.0
    %299 = vmatpush1.xpose.msra.mxu0 0.0
    %300 = vmatprep.subr.mxu0 0.0
    %301 = vmatpush1.xpose.msra.mxu0 %v268
    %302 = vmatprep.subr.mxu0 0.0
    %303 = vmatpush2.xpose.msra.mxu0 0.0
    %304 = vmatprep.subr.mxu0 0.0
    %305 = vmatpush2.xpose.msra.mxu0 0.0
    %306 = vmatprep.subr.mxu0 0.0
    %307 = vmatpush2.xpose.msra.mxu0 0.0
    %308 = vmatprep.subr.mxu0 0.0
    %309 = vmatpush2.xpose.msra.mxu0 0.0
    %310 = vmatprep.subr.mxu0 0.0
    %311 = vmatpush2.xpose.msra.mxu0 0.0
    %312 = vmatprep.subr.mxu0 0.0
    %313 = vmatpush2.xpose.msra.mxu0 0.0
    %314 = vmatprep.subr.mxu0 0.0
    %315 = vmatpush2.xpose.msra.mxu0 0.0
    %316 = vmatprep.subr.mxu0 0.0
    %317 = vmatpush2.xpose.msra.mxu0 0.0
    %318 = vmatprep.subr.mxu0 0.0
    %319 = vmatpush2.xpose.msra.mxu0 0.0
    %320 = vmatprep.subr.mxu0 0.0
    %321 = vmatpush2.xpose.msra.mxu0 0.0
    %322 = vmatprep.subr.mxu0 0.0
    %323 = vmatpush2.xpose.msra.mxu0 0.0
    %324 = vmatprep.subr.mxu0 0.0
    %325 = vmatpush2.xpose.msra.mxu0 0.0
    %326 = vmatprep.subr.mxu0 0.0
    %327 = vmatpush2.xpose.msra.mxu0 0.0
    %328 = vmatprep.subr.mxu0 0.0
    %329 = vmatpush2.xpose.msra.mxu0 0.0
    %330 = vmatprep.subr.mxu0 0.0
    %331 = vmatpush2.xpose.msra.mxu0 0.0
    %332 = vmatprep.subr.mxu0 0.0
    %333 = vmatpush2.xpose.msra.mxu0 0.0
    %334 = vmatprep.mubr.f32.mxu0 0.0
    %335 = vmatmul.mubr.f32.gmra.mxu0 %v265
    %v336 = vpop.f32.mrf.mxu0
    %v337 = vadd.f32 0.0, %v336
    %v338 = vpop.f32.mrf.mxu0
    %339 = vdwg.mxu0
    %v340 = vld [vmem:[%s2] sm:$0x1]
    %v341 = vld [vmem:[%s2 + $0x1] sm:$0x1]
    %vm342 = vcmp.ne.s32.totalorder %v340, 0
    %vm343 = vcmp.ne.s32.totalorder %v341, 0
    %v344 = vsel %vm342, 1, 0
    %v345 = vsel %vm343, 1, 0
    %v346 = vlaneseq
    %v347 = vshrl.u32 %v346, 7
    %v348 = vsub.s32 0, %v347
    %v349 = vrot.slane %v344, %v348
    %v350 = vlaneseq
    %v351 = vshrl.u32 %v350, 7
    %v352 = vsub.s32 0, %v351
    %v353 = vrot.slane %v345, %v352
    %vm354 = vcmp.eq.s32.totalorder %v349, 1
    %vm355 = vcmp.eq.s32.totalorder %v353, 1
    %v356 = vsel %vm354, -1000000.0, %v261
    %v357 = vsel %vm355, -1000000.0, %v337
    %vm358 = vcmask 60416
    %v359 = vsel %vm358, %v356, -inf
    %360 = vmax.xlane.f32.xlu0 %v359
    %v361 = vpop.xlane.xlu0 %360
    %v362 = vsel %vm358, %v357, -inf
    %363 = vmax.xlane.f32.xlu0 %v362
    %v364 = vpop.xlane.xlu0 %363
    %v365 = vsub.f32 %v356, %v361
    %v366 = vsub.f32 %v357, %v364
    %v367 = vmul.f32 %v365, 1.442695
    %v368 = vpow.pop %v367
    %v369 = vmul.f32 %v366, 1.442695
    %v370 = vpow.pop %v369
    %v371 = vsel %vm358, %v368, 0.0
    %372 = vadd.xlane.f32.xlu0 %v371
    %v373 = vpop.xlane.xlu0 %372
    %v374 = vsel %vm358, %v370, 0.0
    %375 = vadd.xlane.f32.xlu0 %v374
    %v376 = vpop.xlane.xlu0 %375
    %v377 = vrcp.pop %v373
    %v378 = vrcp.pop %v376
    %v379 = vmul.f32 %v368, %v377
    %v380 = vmul.f32 %v370, %v378
    %vm381 = vcmask 64512
    %v383 = vsel %vm381, %v379, 0
    %385 = vmatprep.subr.mxu0 0.0
    %386 = vmatpush1.msra.mxu0 0.0
    %387 = vmatprep.subr.mxu0 0.0
    %388 = vmatpush1.msra.mxu0 0.0
    %389 = vmatprep.subr.mxu0 0.0
    %390 = vmatpush1.msra.mxu0 0.0
    %391 = vmatprep.subr.mxu0 0.0
    %392 = vmatpush1.msra.mxu0 0.0
    %393 = vmatprep.subr.mxu0 0.0
    %394 = vmatpush1.msra.mxu0 0.0
    %395 = vmatprep.subr.mxu0 0.0
    %396 = vmatpush1.msra.mxu0 0.0
    %397 = vmatprep.subr.mxu0 0.0
    %398 = vmatpush1.msra.mxu0 0.0
    %399 = vmatprep.subr.mxu0 0.0
    %400 = vmatpush1.msra.mxu0 0.0
    %401 = vmatprep.subr.mxu0 0.0
    %402 = vmatpush1.msra.mxu0 0.0
    %403 = vmatprep.subr.mxu0 0.0
    %404 = vmatpush1.msra.mxu0 0.0
    %405 = vmatprep.subr.mxu0 0.0
    %406 = vmatpush1.msra.mxu0 0.0
    %407 = vmatprep.subr.mxu0 0.0
    %408 = vmatpush1.msra.mxu0 0.0
    %409 = vmatprep.subr.mxu0 0.0
    %410 = vmatpush1.msra.mxu0 0.0
    %411 = vmatprep.subr.mxu0 0.0
    %412 = vmatpush1.msra.mxu0 0.0
    %413 = vmatprep.subr.mxu0 0.0
    %414 = vmatpush1.msra.mxu0 0.0
    %415 = vmatprep.subr.mxu0 0.0
    %416 = vmatpush1.msra.mxu0 %v98
    %417 = vmatprep.subr.mxu0 0.0
    %418 = vmatpush2.msra.mxu0 0.0
    %419 = vmatprep.subr.mxu0 0.0
    %420 = vmatpush2.msra.mxu0 0.0
    %421 = vmatprep.subr.mxu0 0.0
    %422 = vmatpush2.msra.mxu0 0.0
    %423 = vmatprep.subr.mxu0 0.0
    %424 = vmatpush2.msra.mxu0 0.0
    %425 = vmatprep.subr.mxu0 0.0
    %426 = vmatpush2.msra.mxu0 0.0
    %427 = vmatprep.subr.mxu0 0.0
    %428 = vmatpush2.msra.mxu0 0.0
    %429 = vmatprep.subr.mxu0 0.0
    %430 = vmatpush2.msra.mxu0 0.0
    %431 = vmatprep.subr.mxu0 0.0
    %432 = vmatpush2.msra.mxu0 0.0
    %433 = vmatprep.subr.mxu0 0.0
    %434 = vmatpush2.msra.mxu0 0.0
    %435 = vmatprep.subr.mxu0 0.0
    %436 = vmatpush2.msra.mxu0 0.0
    %437 = vmatprep.subr.mxu0 0.0
    %438 = vmatpush2.msra.mxu0 0.0
    %439 = vmatprep.subr.mxu0 0.0
    %440 = vmatpush2.msra.mxu0 0.0
    %441 = vmatprep.subr.mxu0 0.0
    %442 = vmatpush2.msra.mxu0 0.0
    %443 = vmatprep.subr.mxu0 0.0
    %444 = vmatpush2.msra.mxu0 0.0
    %445 = vmatprep.subr.mxu0 0.0
    %446 = vmatpush2.msra.mxu0 0.0
    %447 = vmatprep.subr.mxu0 0.0
    %448 = vmatpush2.msra.mxu0 0.0
    %449 = vmatprep.mubr.f32.mxu0 0.0
    %450 = vmatmul.mubr.f32.gmra.mxu0 %v383
    %v451 = vpop.f32.mrf.mxu0
    %v452 = vadd.f32 0.0, %v451
    %v453 = vpop.f32.mrf.mxu0
    %454 = vdwg.mxu0
    %v456 = vsel %vm381, %v380, 0
    %458 = vmatprep.subr.mxu0 0.0
    %459 = vmatpush1.msra.mxu0 0.0
    %460 = vmatprep.subr.mxu0 0.0
    %461 = vmatpush1.msra.mxu0 0.0
    %462 = vmatprep.subr.mxu0 0.0
    %463 = vmatpush1.msra.mxu0 0.0
    %464 = vmatprep.subr.mxu0 0.0
    %465 = vmatpush1.msra.mxu0 0.0
    %466 = vmatprep.subr.mxu0 0.0
    %467 = vmatpush1.msra.mxu0 0.0
    %468 = vmatprep.subr.mxu0 0.0
    %469 = vmatpush1.msra.mxu0 0.0
    %470 = vmatprep.subr.mxu0 0.0
    %471 = vmatpush1.msra.mxu0 0.0
    %472 = vmatprep.subr.mxu0 0.0
    %473 = vmatpush1.msra.mxu0 0.0
    %474 = vmatprep.subr.mxu0 0.0
    %475 = vmatpush1.msra.mxu0 0.0
    %476 = vmatprep.subr.mxu0 0.0
    %477 = vmatpush1.msra.mxu0 0.0
    %478 = vmatprep.subr.mxu0 0.0
    %479 = vmatpush1.msra.mxu0 0.0
    %480 = vmatprep.subr.mxu0 0.0
    %481 = vmatpush1.msra.mxu0 0.0
    %482 = vmatprep.subr.mxu0 0.0
    %483 = vmatpush1.msra.mxu0 0.0
    %484 = vmatprep.subr.mxu0 0.0
    %485 = vmatpush1.msra.mxu0 0.0
    %486 = vmatprep.subr.mxu0 0.0
    %487 = vmatpush1.msra.mxu0 0.0
    %488 = vmatprep.subr.mxu0 0.0
    %489 = vmatpush1.msra.mxu0 %v99
    %490 = vmatprep.subr.mxu0 0.0
    %491 = vmatpush2.msra.mxu0 0.0
    %492 = vmatprep.subr.mxu0 0.0
    %493 = vmatpush2.msra.mxu0 0.0
    %494 = vmatprep.subr.mxu0 0.0
    %495 = vmatpush2.msra.mxu0 0.0
    %496 = vmatprep.subr.mxu0 0.0
    %497 = vmatpush2.msra.mxu0 0.0
    %498 = vmatprep.subr.mxu0 0.0
    %499 = vmatpush2.msra.mxu0 0.0
    %500 = vmatprep.subr.mxu0 0.0
    %501 = vmatpush2.msra.mxu0 0.0
    %502 = vmatprep.subr.mxu0 0.0
    %503 = vmatpush2.msra.mxu0 0.0
    %504 = vmatprep.subr.mxu0 0.0
    %505 = vmatpush2.msra.mxu0 0.0
    %506 = vmatprep.subr.mxu0 0.0
    %507 = vmatpush2.msra.mxu0 0.0
    %508 = vmatprep.subr.mxu0 0.0
    %509 = vmatpush2.msra.mxu0 0.0
    %510 = vmatprep.subr.mxu0 0.0
    %511 = vmatpush2.msra.mxu0 0.0
    %512 = vmatprep.subr.mxu0 0.0
    %513 = vmatpush2.msra.mxu0 0.0
    %514 = vmatprep.subr.mxu0 0.0
    %515 = vmatpush2.msra.mxu0 0.0
    %516 = vmatprep.subr.mxu0 0.0
    %517 = vmatpush2.msra.mxu0 0.0
    %518 = vmatprep.subr.mxu0 0.0
    %519 = vmatpush2.msra.mxu0 0.0
    %520 = vmatprep.subr.mxu0 0.0
    %521 = vmatpush2.msra.mxu0 0.0
    %522 = vmatprep.mubr.f32.mxu0 0.0
    %523 = vmatmul.mubr.f32.gmra.mxu0 %v456
    %v524 = vpop.f32.mrf.mxu0
    %v525 = vadd.f32 0.0, %v524
    %v526 = vpop.f32.mrf.mxu0
    %527 = vdwg.mxu0
    %v528 = vld [vmem:[#allocation8] sm:$0xff]
    %v529 = vld [vmem:[#allocation8 + $0x8] sm:$0xff]
    %v530 = vld [vmem:[#allocation8 + $0x10] sm:$0xff]
    %v531 = vld [vmem:[#allocation8 + $0x18] sm:$0xff]
    %v532 = vld [vmem:[#allocation10] sm:$0xff]
    %v533 = vld [vmem:[#allocation10 + $0x8] sm:$0xff]
    %v534 = vld [vmem:[#allocation10 + $0x10] sm:$0xff]
    %v535 = vld [vmem:[#allocation10 + $0x18] sm:$0xff]
    %v536 = vcombine.low %v100, %v101
    %v537 = vsel %vm106, %v536, 0
    %539 = vmatprep.subr.mxu0 0.0
    %540 = vmatpush1.msra.mxu0 0.0
    %541 = vmatprep.subr.mxu0 0.0
    %542 = vmatpush1.msra.mxu0 0.0
    %543 = vmatprep.subr.mxu0 0.0
    %544 = vmatpush1.msra.mxu0 0.0
    %545 = vmatprep.subr.mxu0 0.0
    %546 = vmatpush1.msra.mxu0 0.0
    %547 = vmatprep.subr.mxu0 0.0
    %548 = vmatpush1.msra.mxu0 0.0
    %549 = vmatprep.subr.mxu0 0.0
    %550 = vmatpush1.msra.mxu0 0.0
    %551 = vmatprep.subr.mxu0 0.0
    %552 = vmatpush1.msra.mxu0 0.0
    %553 = vmatprep.subr.mxu0 0.0
    %554 = vmatpush1.msra.mxu0 0.0
    %555 = vmatprep.subr.mxu0 0.0
    %556 = vmatpush1.msra.mxu0 0.0
    %557 = vmatprep.subr.mxu0 0.0
    %558 = vmatpush1.msra.mxu0 0.0
    %559 = vmatprep.subr.mxu0 0.0
    %560 = vmatpush1.msra.mxu0 0.0
    %561 = vmatprep.subr.mxu0 0.0
    %562 = vmatpush1.msra.mxu0 0.0
    %563 = vmatprep.subr.mxu0 0.0
    %564 = vmatpush1.msra.mxu0 %v535
    %565 = vmatprep.subr.mxu0 0.0
    %566 = vmatpush1.msra.mxu0 %v534
    %567 = vmatprep.subr.mxu0 0.0
    %568 = vmatpush1.msra.mxu0 %v533
    %569 = vmatprep.subr.mxu0 0.0
    %570 = vmatpush1.msra.mxu0 %v532
    %571 = vmatprep.subr.mxu0 0.0
    %572 = vmatpush2.msra.mxu0 0.0
    %573 = vmatprep.subr.mxu0 0.0
    %574 = vmatpush2.msra.mxu0 0.0
    %575 = vmatprep.subr.mxu0 0.0
    %576 = vmatpush2.msra.mxu0 0.0
    %577 = vmatprep.subr.mxu0 0.0
    %578 = vmatpush2.msra.mxu0 0.0
    %579 = vmatprep.subr.mxu0 0.0
    %580 = vmatpush2.msra.mxu0 0.0
    %581 = vmatprep.subr.mxu0 0.0
    %582 = vmatpush2.msra.mxu0 0.0
    %583 = vmatprep.subr.mxu0 0.0
    %584 = vmatpush2.msra.mxu0 0.0
    %585 = vmatprep.subr.mxu0 0.0
    %586 = vmatpush2.msra.mxu0 0.0
    %587 = vmatprep.subr.mxu0 0.0
    %588 = vmatpush2.msra.mxu0 0.0
    %589 = vmatprep.subr.mxu0 0.0
    %590 = vmatpush2.msra.mxu0 0.0
    %591 = vmatprep.subr.mxu0 0.0
    %592 = vmatpush2.msra.mxu0 0.0
    %593 = vmatprep.subr.mxu0 0.0
    %594 = vmatpush2.msra.mxu0 0.0
    %595 = vmatprep.subr.mxu0 0.0
    %596 = vmatpush2.msra.mxu0 0.0
    %597 = vmatprep.subr.mxu0 0.0
    %598 = vmatpush2.msra.mxu0 0.0
    %599 = vmatprep.subr.mxu0 0.0
    %600 = vmatpush2.msra.mxu0 0.0
    %601 = vmatprep.subr.mxu0 0.0
    %602 = vmatpush2.msra.mxu0 0.0
    %603 = vmatprep.mubr.f32.mxu0 0.0
    %604 = vmatmul.mubr.f32.gmra.mxu0 %v537
    %v605 = vpop.f32.mrf.mxu0
    %v606 = vadd.f32 0.0, %v605
    %v607 = vpop.f32.mrf.mxu0
    %608 = vdwg.mxu0
    %v611 = vcombine.low %v452, %v525
    %v612 = vsel %vm106, %v611, 0
    %614 = vmatprep.subr.mxu0 0.0
    %615 = vmatpush1.msra.mxu0 0.0
    %616 = vmatprep.subr.mxu0 0.0
    %617 = vmatpush1.msra.mxu0 0.0
    %618 = vmatprep.subr.mxu0 0.0
    %619 = vmatpush1.msra.mxu0 0.0
    %620 = vmatprep.subr.mxu0 0.0
    %621 = vmatpush1.msra.mxu0 0.0
    %622 = vmatprep.subr.mxu0 0.0
    %623 = vmatpush1.msra.mxu0 0.0
    %624 = vmatprep.subr.mxu0 0.0
    %625 = vmatpush1.msra.mxu0 0.0
    %626 = vmatprep.subr.mxu0 0.0
    %627 = vmatpush1.msra.mxu0 0.0
    %628 = vmatprep.subr.mxu0 0.0
    %629 = vmatpush1.msra.mxu0 0.0
    %630 = vmatprep.subr.mxu0 0.0
    %631 = vmatpush1.msra.mxu0 0.0
    %632 = vmatprep.subr.mxu0 0.0
    %633 = vmatpush1.msra.mxu0 0.0
    %634 = vmatprep.subr.mxu0 0.0
    %635 = vmatpush1.msra.mxu0 0.0
    %636 = vmatprep.subr.mxu0 0.0
    %637 = vmatpush1.msra.mxu0 0.0
    %638 = vmatprep.subr.mxu0 0.0
    %639 = vmatpush1.msra.mxu0 %v531
    %640 = vmatprep.subr.mxu0 0.0
    %641 = vmatpush1.msra.mxu0 %v530
    %642 = vmatprep.subr.mxu0 0.0
    %643 = vmatpush1.msra.mxu0 %v529
    %644 = vmatprep.subr.mxu0 0.0
    %645 = vmatpush1.msra.mxu0 %v528
    %646 = vmatprep.subr.mxu0 0.0
    %647 = vmatpush2.msra.mxu0 0.0
    %648 = vmatprep.subr.mxu0 0.0
    %649 = vmatpush2.msra.mxu0 0.0
    %650 = vmatprep.subr.mxu0 0.0
    %651 = vmatpush2.msra.mxu0 0.0
    %652 = vmatprep.subr.mxu0 0.0
    %653 = vmatpush2.msra.mxu0 0.0
    %654 = vmatprep.subr.mxu0 0.0
    %655 = vmatpush2.msra.mxu0 0.0
    %656 = vmatprep.subr.mxu0 0.0
    %657 = vmatpush2.msra.mxu0 0.0
    %658 = vmatprep.subr.mxu0 0.0
    %659 = vmatpush2.msra.mxu0 0.0
    %660 = vmatprep.subr.mxu0 0.0
    %661 = vmatpush2.msra.mxu0 0.0
    %662 = vmatprep.subr.mxu0 0.0
    %663 = vmatpush2.msra.mxu0 0.0
    %664 = vmatprep.subr.mxu0 0.0
    %665 = vmatpush2.msra.mxu0 0.0
    %666 = vmatprep.subr.mxu0 0.0
    %667 = vmatpush2.msra.mxu0 0.0
    %668 = vmatprep.subr.mxu0 0.0
    %669 = vmatpush2.msra.mxu0 0.0
    %670 = vmatprep.subr.mxu0 0.0
    %671 = vmatpush2.msra.mxu0 0.0
    %672 = vmatprep.subr.mxu0 0.0
    %673 = vmatpush2.msra.mxu0 0.0
    %674 = vmatprep.subr.mxu0 0.0
    %675 = vmatpush2.msra.mxu0 0.0
    %676 = vmatprep.subr.mxu0 0.0
    %677 = vmatpush2.msra.mxu0 0.0
    %678 = vmatprep.mubr.f32.mxu0 0.0
    %679 = vmatmul.mubr.f32.gmra.mxu0 %v612
    %v680 = vpop.f32.mrf.mxu0
    %v681 = vadd.f32 %v606, %v680
    %v682 = vpop.f32.mrf.mxu0
    %683 = vdwg.mxu0
    %v684 = vld [vmem:[%s6] sm:$0x1]
    %v686 = vlaneseq
    %v687 = vshrl.u32 %v686, 7
    %v688 = vsub.s32 0, %v687
    %v689 = vrot.slane %v684, %v688
    %v691 = vadd.f32 %v681, %v689
    %v692 = vtanh.pop %v691
    %v694 = vcombine.high %v692, %v692
    %vm696 = vcmask 257024
    %697 = vst.msk [vmem:[#allocation11] sm:$0xf] %vm696, %v692
    %698 = vst.msk [vmem:[#allocation11 + $0x4] sm:$0xf] %vm696, %v694
    %699 = vst.msk [vmem:[#allocation12] sm:$0xf] %vm358, %v379
    %700 = vst.msk [vmem:[#allocation12 + $0x4] sm:$0xf] %vm358, %v380
    // Predicated region
    $region50: #{tpu_custom_call.1} parent=1 // pred_check
      _
    $region51: #{tpu_custom_call.1} parent=1 // pred_check_branch
      %702 = sbr.rel (0) target = $region53
    $region52: #{tpu_custom_call.1} parent=1 // pred_region
      %s704 = ssub.s32 128, 128
      %705 = vsyncadd [#allocation4], %s704
      %s706 = sshll.u32 [#allocation11], 4
      %s707 = int_to_ptr.vmem [resolvable:$true] %s706
      %712 = dma.vmem_to_hbm [thread:$0]  %s707, 128, %s7, [#allocation4], 64, 64, 4
    $region53: #{tpu_custom_call.1} parent=1 // pred_fallthru
      _
    // Predicated region
    $region54: #{tpu_custom_call.1} parent=1 // pred_check
      _
    $region55: #{tpu_custom_call.1} parent=1 // pred_check_branch
      %714 = sbr.rel (0) target = $region57
    $region56: #{tpu_custom_call.1} parent=1 // pred_region
      %s716 = ssub.s32 128, 128
      %717 = vsyncadd [#allocation13], %s716
      %s718 = sshll.u32 [#allocation12], 4
      %s719 = int_to_ptr.vmem [resolvable:$true] %s718
      %724 = dma.vmem_to_hbm [thread:$0]  %s719, 128, %s8, [#allocation13], 64, 64, 4
    $region57: #{tpu_custom_call.1} parent=1 // pred_fallthru
      _
    // Predicated region
    $region58: #{tpu_custom_call.1} parent=1 // pred_check
      _
    $region59: #{tpu_custom_call.1} parent=1 // pred_check_branch
      %726 = sbr.rel (0) target = $region61
    $region60: #{tpu_custom_call.1} parent=1 // pred_region
      %727 = dma.done [#allocation4], 128
    $region61: #{tpu_custom_call.1} parent=1 // pred_fallthru
      _
    // Predicated region
    $region62: #{tpu_custom_call.1} parent=1 // pred_check
      _
    $region63: #{tpu_custom_call.1} parent=1 // pred_check_branch
      %729 = sbr.rel (0) target = $region65
    $region64: #{tpu_custom_call.1} parent=1 // pred_region
      %730 = dma.done [#allocation13], 128
    $region65: #{tpu_custom_call.1} parent=1 // pred_fallthru
      _
    %731 = vsyncpa [#allocation3], 1
    %732 = vsyncpa [#allocation6], 1
    %733 = vsyncpa [#allocation9], 1
    %734 = vsyncpa [#allocation4], 1
    %735 = vsyncpa [#allocation13], 1

</llo_original>
